<compile_context>
chip_gen: v6e
topology: v6e:2x2x1
jax: 0.10.0
libtpu: 0.0.40
codegen_flags: <defaults>
</compile_context>

<pallas_src>
import functools

import jax
import jax.numpy as jnp
from jax import lax
from jax.experimental import pallas as pl
from jax.experimental.pallas import tpu as pltpu


def _attn_pool_kernel(x_ref, w_ref, o_ref, m_sc, l_sc, acc_sc, *, mm_dtype):
    """One (batch-tile, class-tile, seq-tile) step of
        alpha = softmax(X @ W^T, dim=seq);  out = alpha^T @ X   (per batch element)

    x_ref: (bt, tl, D) VMEM   w_ref: (tc, D) VMEM   o_ref: (bt, tc, D) VMEM
    m_sc / l_sc: (bt, tc, 1) f32 scratch   acc_sc: (bt, tc, D) f32 scratch
    The sequence axis is the last ("arbitrary") grid axis; scratch carries the
    online-softmax state, so score tiles and X DMA tiles stay bounded for any L.
    """
    lt = pl.program_id(2)

    @pl.when(lt == 0)
    def _init():
        m_sc[...] = jnp.full(m_sc.shape, -jnp.inf, m_sc.dtype)
        l_sc[...] = jnp.zeros(l_sc.shape, l_sc.dtype)
        acc_sc[...] = jnp.zeros(acc_sc.shape, acc_sc.dtype)

    w = w_ref[...]
    if mm_dtype is not None:
        w = w.astype(mm_dtype)

    bt = x_ref.shape[0]
    for b in range(bt):  # small static unroll over the batch tile
        x = x_ref[b]                                   # (tl, D)
        xm = x if mm_dtype is None else x.astype(mm_dtype)

        # Scores in (class, seq) orientation: contract the LAST dims of both
        # operands (A @ B^T form) -- MXU-native, no in-kernel transpose.
        s = lax.dot_general(
            w, xm,
            dimension_numbers=(((1,), (1,)), ((), ())),
            preferred_element_type=jnp.float32,
        )                                              # (tc, tl) f32

        # Online (flash-style) softmax over the sequence (lane) axis.
        m_prev = m_sc[b]                               # (tc, 1)
        m_new = jnp.maximum(m_prev, jnp.max(s, axis=-1, keepdims=True))
        corr = jnp.exp(m_prev - m_new)                 # rescale of old partials
        p = jnp.exp(s - m_new)                         # (tc, tl), UNNORMALIZED
        l_sc[b] = corr * l_sc[b] + jnp.sum(p, axis=-1, keepdims=True)

        # Pool with unnormalized probabilities; the softmax denominator is
        # applied once to the (tc, D) f32 accumulator at finalize -- cheaper
        # than normalizing the (tc, L) tile and numerically as good or better.
        pool = lax.dot_general(
            p.astype(xm.dtype), xm,
            dimension_numbers=(((1,), (0,)), ((), ())),
            preferred_element_type=jnp.float32,
        )                                              # (tc, D) f32
        acc_sc[b] = corr * acc_sc[b] + pool
        m_sc[b] = m_new

    @pl.when(lt == pl.num_programs(2) - 1)
    def _finalize():
        # Exact reciprocal on a tiny (bt, tc, 1) tensor, broadcast over D.
        inv_l = 1.0 / l_sc[...]
        o_ref[...] = (acc_sc[...] * inv_l).astype(o_ref.dtype)


def _tile_candidates(n, opts):
    """Descending divisor tile candidates for an axis of size n (full extent
    is always included -- full-extent blocks are always layout-legal)."""
    cands = {n}
    cands.update(t for t in opts if t < n and n % t == 0)
    return sorted(cands, reverse=True)


def _vmem_limit_bytes():
    """Scoped-VMEM limit with headroom for Mosaic internal scratch.

    v7x has only 64 MiB of physical VMEM per TensorCore; claiming all of it
    risks compile failure / forced spills, so use 3/4 of physical, capped.
    """
    phys = 64 * 1024 * 1024  # assume the smallest current generation if unknown
    try:
        phys = pltpu.get_tpu_info().vmem_capacity_bytes
    except Exception:  # best-effort hardware query
        pass
    return min((phys * 3) // 4, 96 * 1024 * 1024)


def _choose_tiles(B, L, C, D, itemsize, budget):
    """Pick (bt, tc, tl) so the per-step working set fits `budget` bytes.

    Preference order: a large class tile first (minimizes re-reads of the
    dominant X stream when both C and L need tiling), then a large sequence
    tile (DMA efficiency), then batch blocking (amortizes per-step overhead).
    """

    def fits(bt, tc, tl):
        x_blk = 2 * bt * tl * D * itemsize          # double-buffered X tile
        w_blk = 2 * tc * D * itemsize               # double-buffered W tile
        o_blk = 2 * bt * tc * D * itemsize          # double-buffered out tile
        scratch = 4 * bt * tc * (D + 2 * 128)       # f32 acc + m/l (lane-padded)
        temps = 3 * 4 * tc * max(tl, 128)           # s / p / exp f32 temporaries
        return x_blk + w_blk + o_blk + scratch + temps <= budget

    l_cands = _tile_candidates(L, (4096, 2048, 1024, 512, 256, 128, 64, 32, 16, 8))
    c_cands = _tile_candidates(C, (512, 256, 128, 64, 32, 16, 8))
    # Cap the batch tile at 8: it exists only to amortize the ~0.35us/step
    # pipeline overhead on tiny working sets; larger values would starve v7x's
    # batch-axis core sharding.
    b_cands = [t for t in (8, 4, 2, 1) if t <= B and B % t == 0] or [1]

    # Moderate L tile used while sizing the class tile (DMA sweet spot ~512 rows).
    tl0 = next((t for t in l_cands if t <= 512), l_cands[-1])
    tc = next((t for t in c_cands if fits(1, t, tl0)), c_cands[-1])
    tl = next((t for t in l_cands if fits(1, tc, t)), l_cands[-1])
    bt = next((t for t in b_cands if fits(t, tc, tl)), 1)
    return bt, tc, tl


def attention_pool(x, w, *, matmul_dtype=None):
    """Fused: alpha = softmax(x @ w^T, axis=1); return einsum('blc,bld->bcd', alpha, x).

    x: (B, L, D), w: (C, D) -> (B, C, D) in x.dtype.
    NOTE: a bias added to the scores (as in nn.Linear) is constant along the
    softmax axis (dim=1, the sequence) and cancels inside softmax; it is
    intentionally omitted.  This relies on softmax being over dim=1.
    """
    B, L, D = x.shape
    C, Dw = w.shape
    assert D == Dw, (D, Dw)

    itemsize = jnp.dtype(x.dtype).itemsize
    vmem_limit = _vmem_limit_bytes()
    bt, tc, tl = _choose_tiles(B, L, C, D, itemsize, vmem_limit // 2)
    grid = (B // bt, C // tc, L // tl)
    # TODO(synk): class counts with no sublane-friendly divisor fall back to a
    # full-extent class tile; pad C upstream if that overruns VMEM at huge C*D.

    grid_spec = pltpu.PrefetchScalarGridSpec(
        num_scalar_prefetch=0,
        grid=grid,
        in_specs=[
            # X tile is independent of the class axis -> revisited (no re-DMA)
            # across class tiles whenever L fits in a single tile.
            pl.BlockSpec((bt, tl, D), lambda b, cb, lt: (b, lt, 0)),
            pl.BlockSpec((tc, D), lambda b, cb, lt: (cb, 0)),
        ],
        out_specs=pl.BlockSpec((bt, tc, D), lambda b, cb, lt: (b, cb, 0)),
        scratch_shapes=[
            pltpu.VMEM((bt, tc, 1), jnp.float32),   # running max   m
            pltpu.VMEM((bt, tc, 1), jnp.float32),   # running sum   l
            pltpu.VMEM((bt, tc, D), jnp.float32),   # running pool accumulator
        ],
    )

    cost = pl.CostEstimate(
        flops=4 * B * C * L * D,                       # two matmuls
        transcendentals=B * C * L,                     # exp of the score tile
        bytes_accessed=(B * L * D + C * D + B * C * D) * itemsize,
    )

    kernel = functools.partial(_attn_pool_kernel, mm_dtype=matmul_dtype)
    return pl.pallas_call(
        kernel,
        out_shape=jax.ShapeDtypeStruct((B, C, D), x.dtype),
        grid_spec=grid_spec,
        compiler_params=pltpu.CompilerParams(
            # Batch axis "parallel" (v7x 2-TC sharding without duplicating the
            # X stream); class axis "arbitrary" (deliberately kept off core
            # sharding); sequence axis "arbitrary" (online-softmax reduction).
            dimension_semantics=("parallel", "arbitrary", "arbitrary"),
            vmem_limit_bytes=vmem_limit,
        ),
        cost_estimate=cost,
    )(x, w)


def pseudolabel_attention_forward(x, lab_desc_vec, layers=(), *, matmul_dtype=None):
    """JAX/Pallas port of pseudolabelAttention.forward (inference mode).

    x:            (B, L, inSize)
    lab_desc_vec: (classNum, finalSize)
    layers:       per-attnList-entry dicts with keys
                  attn_w (os, in), attn_b (os,), hdn_w (out, in), hdn_b (out,),
                  bn_gamma / bn_beta / bn_mean / bn_var (out,)
    """
    eps = 1e-5
    for lp in layers:
        # alpha = softmax(X @ Wa^T + ba, dim=1); X = alpha^T @ X
        # (the attention Linear bias cancels inside softmax over dim=1)
        x = attention_pool(x, lp["attn_w"], matmul_dtype=matmul_dtype)
        x = x @ lp["hdn_w"].T + lp["hdn_b"]
        # BatchNorm1d over the feature/channel dim (eval mode, running stats).
        x = (x - lp["bn_mean"]) / jnp.sqrt(lp["bn_var"] + eps) * lp["bn_gamma"] + lp["bn_beta"]
        x = jax.nn.relu(x)
        # TODO(synk): Dropout / BatchNorm1d use eval-mode semantics; training-mode
        # stochastic dropout and batch-statistics BN are not implemented here.
    return attention_pool(x, lab_desc_vec, matmul_dtype=matmul_dtype)


def _ref_forward(x, lab_desc_vec, layers=()):
    """Pure-JAX reference mirroring the PyTorch forward (eval mode)."""
    eps = 1e-5
    for lp in layers:
        scores = jnp.einsum("bld,cd->blc", x, lp["attn_w"]) + lp["attn_b"]
        alpha = jax.nn.softmax(scores, axis=1)
        x = jnp.einsum("blc,bld->bcd", alpha, x)
        x = x @ lp["hdn_w"].T + lp["hdn_b"]
        x = (x - lp["bn_mean"]) / jnp.sqrt(lp["bn_var"] + eps) * lp["bn_gamma"] + lp["bn_beta"]
        x = jax.nn.relu(x)
    scores = jnp.einsum("bld,cd->blc", x, lab_desc_vec)
    alpha = jax.nn.softmax(scores, axis=1)
    return jnp.einsum("blc,bld->bcd", alpha, x)


if __name__ == "__main__":
    key = jax.random.PRNGKey(0)
    ks = jax.random.split(key, 8)

    # Small shapes implied by the module: batch=2, seq=16, inSize=128, classNum=8.
    B, L, in_size, class_num = 2, 16, 128, 8
    x = jax.random.normal(ks[0], (B, L, in_size), dtype=jnp.float32) * 0.25

    # --- Default config (attnList=[]): forward == one fused attention pool ----
    lab_desc = jax.random.normal(ks[1], (class_num, in_size), dtype=jnp.float32) * 0.25
    out = jax.block_until_ready(pseudolabel_attention_forward(x, lab_desc))
    ref = _ref_forward(x, lab_desc)
    assert out.shape == (B, class_num, in_size)
    assert bool(jnp.allclose(out, ref, atol=1e-2, rtol=1e-2))

    # --- One hidden attention layer (attnList=[16], labSize=256) --------------
    os_, lab_size = 16, 256
    layer = dict(
        attn_w=jax.random.normal(ks[2], (os_, in_size), jnp.float32) / jnp.sqrt(in_size),
        attn_b=jax.random.normal(ks[3], (os_,), jnp.float32) * 0.1,
        hdn_w=jax.random.normal(ks[4], (lab_size, in_size), jnp.float32) / jnp.sqrt(in_size),
        hdn_b=jax.random.normal(ks[5], (lab_size,), jnp.float32) * 0.1,
        bn_gamma=jnp.ones((lab_size,), jnp.float32),
        bn_beta=jnp.zeros((lab_size,), jnp.float32),
        bn_mean=jnp.zeros((lab_size,), jnp.float32),
        bn_var=jnp.ones((lab_size,), jnp.float32),
    )
    lab_desc2 = jax.random.normal(ks[6], (class_num, lab_size), jnp.float32) / jnp.sqrt(lab_size)
    out2 = jax.block_until_ready(pseudolabel_attention_forward(x, lab_desc2, (layer,)))
    ref2 = _ref_forward(x, lab_desc2, (layer,))
    assert out2.shape == (B, class_num, lab_size)
    assert bool(jnp.allclose(out2, ref2, atol=1e-2, rtol=1e-2))

    # --- Optional bf16-matmul path (softmax math stays f32) -------------------
    out3 = jax.block_until_ready(
        pseudolabel_attention_forward(x, lab_desc, matmul_dtype=jnp.bfloat16))
    assert bool(jnp.allclose(out3, ref, atol=5e-2, rtol=5e-2))

    print("KERNEL_OK")
</pallas_src>

<mosaic_0001>
module attributes {stable_mosaic.version = 11 : i64} {
  func.func @_attn_pool_kernel(%arg0: i32, %arg1: i32, %arg2: i32, %arg3: memref<2x16x128xf32, #tpu.memory_space<vmem>>, %arg4: memref<8x128xf32, #tpu.memory_space<vmem>>, %arg5: memref<2x8x128xf32, #tpu.memory_space<vmem>>, %arg6: memref<2x8x1xf32, #tpu.memory_space<vmem>>, %arg7: memref<2x8x1xf32, #tpu.memory_space<vmem>>, %arg8: memref<2x8x128xf32, #tpu.memory_space<vmem>>) attributes {dimension_semantics = [#tpu.dimension_semantics<parallel>, #tpu.dimension_semantics<arbitrary>, #tpu.dimension_semantics<arbitrary>], iteration_bounds = array<i64: 1, 1, 1>, scalar_prefetch = 0 : i64, scratch_operands = 3 : i64, tpu.core_type = #tpu.core_type<tc>, window_params = [{transform_indices = @transform_0, window_bounds = array<i64: 2, 16, 128>}, {transform_indices = @transform_1, window_bounds = array<i64: 8, 128>}, {transform_indices = @transform_2, window_bounds = array<i64: 2, 8, 128>}]} {
    %c0_i32 = arith.constant 0 : i32
    %0 = arith.cmpi eq, %arg2, %c0_i32 : i32
    %1 = arith.extui %0 : i1 to i32
    %c0_i32_0 = arith.constant 0 : i32
    %2 = arith.cmpi ne, %1, %c0_i32_0 : i32
    scf.if %2 {
      %cst_52 = arith.constant 0xFF800000 : f32
      %75 = vector.broadcast %cst_52 : f32 to vector<2x8x1xf32>
      %c0_53 = arith.constant 0 : index
      %c0_54 = arith.constant 0 : index
      %c0_55 = arith.constant 0 : index
      %76 = vector.load %arg6[%c0_53, %c0_54, %c0_55] : memref<2x8x1xf32, #tpu.memory_space<vmem>>, vector<2x8x1xf32>
      tpu.vector_store %arg6[%c0_53, %c0_54, %c0_55], %75 {strides = array<i32>} : memref<2x8x1xf32, #tpu.memory_space<vmem>>, vector<2x8x1xf32>,
      %cst_56 = arith.constant 0.000000e+00 : f32
      %77 = vector.broadcast %cst_56 : f32 to vector<2x8x1xf32>
      %c0_57 = arith.constant 0 : index
      %c0_58 = arith.constant 0 : index
      %c0_59 = arith.constant 0 : index
      %78 = vector.load %arg7[%c0_57, %c0_58, %c0_59] : memref<2x8x1xf32, #tpu.memory_space<vmem>>, vector<2x8x1xf32>
      tpu.vector_store %arg7[%c0_57, %c0_58, %c0_59], %77 {strides = array<i32>} : memref<2x8x1xf32, #tpu.memory_space<vmem>>, vector<2x8x1xf32>,
      %cst_60 = arith.constant 0.000000e+00 : f32
      %79 = vector.broadcast %cst_60 : f32 to vector<2x8x128xf32>
      %c0_61 = arith.constant 0 : index
      %c0_62 = arith.constant 0 : index
      %c0_63 = arith.constant 0 : index
      %80 = vector.load %arg8[%c0_61, %c0_62, %c0_63] : memref<2x8x128xf32, #tpu.memory_space<vmem>>, vector<2x8x128xf32>
      tpu.vector_store %arg8[%c0_61, %c0_62, %c0_63], %79 {strides = array<i32>} : memref<2x8x128xf32, #tpu.memory_space<vmem>>, vector<2x8x128xf32>,
    } else {
    }
    %c0 = arith.constant 0 : index
    %c0_1 = arith.constant 0 : index
    %3 = vector.load %arg4[%c0, %c0_1] : memref<8x128xf32, #tpu.memory_space<vmem>>, vector<8x128xf32>
    %c0_2 = arith.constant 0 : index
    %c0_3 = arith.constant 0 : index
    %c0_4 = arith.constant 0 : index
    %4 = vector.load %arg3[%c0_2, %c0_3, %c0_4] : memref<2x16x128xf32, #tpu.memory_space<vmem>>, vector<1x16x128xf32>
    %5 = vector.shape_cast %4 : vector<1x16x128xf32> to vector<16x128xf32>
    %cst = arith.constant dense<0.000000e+00> : vector<8x16xf32>
    %6 = tpu.matmul %3, %5, %cst {dimension_numbers = #tpu.dot_dimension_numbers<[1], [1], [0], [0], [0, 0, 1, 0], [], []>} : vector<8x128xf32>, vector<16x128xf32>, vector<8x16xf32> -> vector<8x16xf32>
    %c0_5 = arith.constant 0 : index
    %c0_6 = arith.constant 0 : index
    %c0_7 = arith.constant 0 : index
    %7 = vector.load %arg6[%c0_5, %c0_6, %c0_7] : memref<2x8x1xf32, #tpu.memory_space<vmem>>, vector<1x8x1xf32>
    %8 = vector.shape_cast %7 : vector<1x8x1xf32> to vector<8x1xf32>
    %cst_8 = arith.constant dense<0xFF800000> : vector<8xf32>
    %9 = vector.multi_reduction <maximumf>, %6, %cst_8 [1] : vector<8x16xf32> to vector<8xf32>
    %10 = vector.shape_cast %9 : vector<8xf32> to vector<8x1xf32>
    %11 = arith.maximumf %8, %10 : vector<8x1xf32>
    %12 = arith.subf %8, %11 : vector<8x1xf32>
    %13 = math.exp %12 : vector<8x1xf32>
    %14 = vector.broadcast %11 : vector<8x1xf32> to vector<8x16xf32>
    %15 = arith.subf %6, %14 : vector<8x16xf32>
    %16 = math.exp %15 : vector<8x16xf32>
    %c0_9 = arith.constant 0 : index
    %c0_10 = arith.constant 0 : index
    %c0_11 = arith.constant 0 : index
    %17 = vector.load %arg7[%c0_9, %c0_10, %c0_11] : memref<2x8x1xf32, #tpu.memory_space<vmem>>, vector<1x8x1xf32>
    %18 = vector.shape_cast %17 : vector<1x8x1xf32> to vector<8x1xf32>
    %19 = arith.mulf %13, %18 : vector<8x1xf32>
    %cst_12 = arith.constant dense<0.000000e+00> : vector<8xf32>
    %20 = vector.multi_reduction <add>, %16, %cst_12 [1] : vector<8x16xf32> to vector<8xf32>
    %21 = vector.shape_cast %20 : vector<8xf32> to vector<8x1xf32>
    %22 = arith.addf %19, %21 : vector<8x1xf32>
    %c0_13 = arith.constant 0 : index
    %c0_14 = arith.constant 0 : index
    %c0_15 = arith.constant 0 : index
    %23 = vector.load %arg7[%c0_13, %c0_14, %c0_15] : memref<2x8x1xf32, #tpu.memory_space<vmem>>, vector<1x8x1xf32>
    %24 = vector.shape_cast %23 : vector<1x8x1xf32> to vector<8x1xf32>
    %25 = vector.shape_cast %22 : vector<8x1xf32> to vector<1x8x1xf32>
    tpu.vector_store %arg7[%c0_13, %c0_14, %c0_15], %25 {strides = array<i32>} : memref<2x8x1xf32, #tpu.memory_space<vmem>>, vector<1x8x1xf32>,
    %cst_16 = arith.constant dense<0.000000e+00> : vector<8x128xf32>
    %26 = tpu.matmul %16, %5, %cst_16 {dimension_numbers = #tpu.dot_dimension_numbers<[1], [0], [0], [1], [0, 0, 1, 1], [], []>} : vector<8x16xf32>, vector<16x128xf32>, vector<8x128xf32> -> vector<8x128xf32>
    %c0_17 = arith.constant 0 : index
    %c0_18 = arith.constant 0 : index
    %c0_19 = arith.constant 0 : index
    %27 = vector.load %arg8[%c0_17, %c0_18, %c0_19] : memref<2x8x128xf32, #tpu.memory_space<vmem>>, vector<1x8x128xf32>
    %28 = vector.shape_cast %27 : vector<1x8x128xf32> to vector<8x128xf32>
    %29 = vector.broadcast %13 : vector<8x1xf32> to vector<8x128xf32>
    %30 = arith.mulf %29, %28 : vector<8x128xf32>
    %31 = arith.addf %30, %26 : vector<8x128xf32>
    %c0_20 = arith.constant 0 : index
    %c0_21 = arith.constant 0 : index
    %c0_22 = arith.constant 0 : index
    %32 = vector.load %arg8[%c0_20, %c0_21, %c0_22] : memref<2x8x128xf32, #tpu.memory_space<vmem>>, vector<1x8x128xf32>
    %33 = vector.shape_cast %32 : vector<1x8x128xf32> to vector<8x128xf32>
    %34 = vector.shape_cast %31 : vector<8x128xf32> to vector<1x8x128xf32>
    tpu.vector_store %arg8[%c0_20, %c0_21, %c0_22], %34 {strides = array<i32>} : memref<2x8x128xf32, #tpu.memory_space<vmem>>, vector<1x8x128xf32>,
    %c0_23 = arith.constant 0 : index
    %c0_24 = arith.constant 0 : index
    %c0_25 = arith.constant 0 : index
    %35 = vector.load %arg6[%c0_23, %c0_24, %c0_25] : memref<2x8x1xf32, #tpu.memory_space<vmem>>, vector<1x8x1xf32>
    %36 = vector.shape_cast %35 : vector<1x8x1xf32> to vector<8x1xf32>
    %37 = vector.shape_cast %11 : vector<8x1xf32> to vector<1x8x1xf32>
    tpu.vector_store %arg6[%c0_23, %c0_24, %c0_25], %37 {strides = array<i32>} : memref<2x8x1xf32, #tpu.memory_space<vmem>>, vector<1x8x1xf32>,
    %c1 = arith.constant 1 : index
    %c0_26 = arith.constant 0 : index
    %c0_27 = arith.constant 0 : index
    %38 = vector.load %arg3[%c1, %c0_26, %c0_27] : memref<2x16x128xf32, #tpu.memory_space<vmem>>, vector<1x16x128xf32>
    %39 = vector.shape_cast %38 : vector<1x16x128xf32> to vector<16x128xf32>
    %cst_28 = arith.constant dense<0.000000e+00> : vector<8x16xf32>
    %40 = tpu.matmul %3, %39, %cst_28 {dimension_numbers = #tpu.dot_dimension_numbers<[1], [1], [0], [0], [0, 0, 1, 0], [], []>} : vector<8x128xf32>, vector<16x128xf32>, vector<8x16xf32> -> vector<8x16xf32>
    %c1_29 = arith.constant 1 : index
    %c0_30 = arith.constant 0 : index
    %c0_31 = arith.constant 0 : index
    %41 = vector.load %arg6[%c1_29, %c0_30, %c0_31] : memref<2x8x1xf32, #tpu.memory_space<vmem>>, vector<1x8x1xf32>
    %42 = vector.shape_cast %41 : vector<1x8x1xf32> to vector<8x1xf32>
    %cst_32 = arith.constant dense<0xFF800000> : vector<8xf32>
    %43 = vector.multi_reduction <maximumf>, %40, %cst_32 [1] : vector<8x16xf32> to vector<8xf32>
    %44 = vector.shape_cast %43 : vector<8xf32> to vector<8x1xf32>
    %45 = arith.maximumf %42, %44 : vector<8x1xf32>
    %46 = arith.subf %42, %45 : vector<8x1xf32>
    %47 = math.exp %46 : vector<8x1xf32>
    %48 = vector.broadcast %45 : vector<8x1xf32> to vector<8x16xf32>
    %49 = arith.subf %40, %48 : vector<8x16xf32>
    %50 = math.exp %49 : vector<8x16xf32>
    %c1_33 = arith.constant 1 : index
    %c0_34 = arith.constant 0 : index
    %c0_35 = arith.constant 0 : index
    %51 = vector.load %arg7[%c1_33, %c0_34, %c0_35] : memref<2x8x1xf32, #tpu.memory_space<vmem>>, vector<1x8x1xf32>
    %52 = vector.shape_cast %51 : vector<1x8x1xf32> to vector<8x1xf32>
    %53 = arith.mulf %47, %52 : vector<8x1xf32>
    %cst_36 = arith.constant dense<0.000000e+00> : vector<8xf32>
    %54 = vector.multi_reduction <add>, %50, %cst_36 [1] : vector<8x16xf32> to vector<8xf32>
    %55 = vector.shape_cast %54 : vector<8xf32> to vector<8x1xf32>
    %56 = arith.addf %53, %55 : vector<8x1xf32>
    %c1_37 = arith.constant 1 : index
    %c0_38 = arith.constant 0 : index
    %c0_39 = arith.constant 0 : index
    %57 = vector.load %arg7[%c1_37, %c0_38, %c0_39] : memref<2x8x1xf32, #tpu.memory_space<vmem>>, vector<1x8x1xf32>
    %58 = vector.shape_cast %57 : vector<1x8x1xf32> to vector<8x1xf32>
    %59 = vector.shape_cast %56 : vector<8x1xf32> to vector<1x8x1xf32>
    tpu.vector_store %arg7[%c1_37, %c0_38, %c0_39], %59 {strides = array<i32>} : memref<2x8x1xf32, #tpu.memory_space<vmem>>, vector<1x8x1xf32>,
    %cst_40 = arith.constant dense<0.000000e+00> : vector<8x128xf32>
    %60 = tpu.matmul %50, %39, %cst_40 {dimension_numbers = #tpu.dot_dimension_numbers<[1], [0], [0], [1], [0, 0, 1, 1], [], []>} : vector<8x16xf32>, vector<16x128xf32>, vector<8x128xf32> -> vector<8x128xf32>
    %c1_41 = arith.constant 1 : index
    %c0_42 = arith.constant 0 : index
    %c0_43 = arith.constant 0 : index
    %61 = vector.load %arg8[%c1_41, %c0_42, %c0_43] : memref<2x8x128xf32, #tpu.memory_space<vmem>>, vector<1x8x128xf32>
    %62 = vector.shape_cast %61 : vector<1x8x128xf32> to vector<8x128xf32>
    %63 = vector.broadcast %47 : vector<8x1xf32> to vector<8x128xf32>
    %64 = arith.mulf %63, %62 : vector<8x128xf32>
    %65 = arith.addf %64, %60 : vector<8x128xf32>
    %c1_44 = arith.constant 1 : index
    %c0_45 = arith.constant 0 : index
    %c0_46 = arith.constant 0 : index
    %66 = vector.load %arg8[%c1_44, %c0_45, %c0_46] : memref<2x8x128xf32, #tpu.memory_space<vmem>>, vector<1x8x128xf32>
    %67 = vector.shape_cast %66 : vector<1x8x128xf32> to vector<8x128xf32>
    %68 = vector.shape_cast %65 : vector<8x128xf32> to vector<1x8x128xf32>
    tpu.vector_store %arg8[%c1_44, %c0_45, %c0_46], %68 {strides = array<i32>} : memref<2x8x128xf32, #tpu.memory_space<vmem>>, vector<1x8x128xf32>,
    %c1_47 = arith.constant 1 : index
    %c0_48 = arith.constant 0 : index
    %c0_49 = arith.constant 0 : index
    %69 = vector.load %arg6[%c1_47, %c0_48, %c0_49] : memref<2x8x1xf32, #tpu.memory_space<vmem>>, vector<1x8x1xf32>
    %70 = vector.shape_cast %69 : vector<1x8x1xf32> to vector<8x1xf32>
    %71 = vector.shape_cast %45 : vector<8x1xf32> to vector<1x8x1xf32>
    tpu.vector_store %arg6[%c1_47, %c0_48, %c0_49], %71 {strides = array<i32>} : memref<2x8x1xf32, #tpu.memory_space<vmem>>, vector<1x8x1xf32>,
    %c0_i32_50 = arith.constant 0 : i32
    %72 = arith.cmpi eq, %arg2, %c0_i32_50 : i32
    %73 = arith.extui %72 : i1 to i32
    %c0_i32_51 = arith.constant 0 : i32
    %74 = arith.cmpi ne, %73, %c0_i32_51 : i32
    scf.if %74 {
      %c0_52 = arith.constant 0 : index
      %c0_53 = arith.constant 0 : index
      %c0_54 = arith.constant 0 : index
      %75 = vector.load %arg7[%c0_52, %c0_53, %c0_54] : memref<2x8x1xf32, #tpu.memory_space<vmem>>, vector<2x8x1xf32>
      %cst_55 = arith.constant 1.000000e+00 : f32
      %76 = vector.broadcast %cst_55 : f32 to vector<2x8x1xf32>
      %77 = arith.divf %76, %75 : vector<2x8x1xf32>
      %c0_56 = arith.constant 0 : index
      %c0_57 = arith.constant 0 : index
      %c0_58 = arith.constant 0 : index
      %78 = vector.load %arg8[%c0_56, %c0_57, %c0_58] : memref<2x8x128xf32, #tpu.memory_space<vmem>>, vector<2x8x128xf32>
      %79 = vector.broadcast %77 : vector<2x8x1xf32> to vector<2x8x128xf32>
      %80 = arith.mulf %78, %79 : vector<2x8x128xf32>
      %c0_59 = arith.constant 0 : index
      %c0_60 = arith.constant 0 : index
      %c0_61 = arith.constant 0 : index
      %81 = vector.load %arg5[%c0_59, %c0_60, %c0_61] : memref<2x8x128xf32, #tpu.memory_space<vmem>>, vector<2x8x128xf32>
      tpu.vector_store %arg5[%c0_59, %c0_60, %c0_61], %80 {strides = array<i32>} : memref<2x8x128xf32, #tpu.memory_space<vmem>>, vector<2x8x128xf32>,
    } else {
    }
    return
  }
  func.func @transform_0(%arg0: i32, %arg1: i32, %arg2: i32) -> (i32, i32, i32) {
    %c0_i32 = arith.constant 0 : i32
    %c0_i32_0 = arith.constant 0 : i32
    return %arg0, %arg2, %c0_i32 : i32, i32, i32
  }
  func.func @transform_1(%arg0: i32, %arg1: i32, %arg2: i32) -> (i32, i32) {
    %c0_i32 = arith.constant 0 : i32
    %c0_i32_0 = arith.constant 0 : i32
    return %arg1, %c0_i32 : i32, i32
  }
  func.func @transform_2(%arg0: i32, %arg1: i32, %arg2: i32) -> (i32, i32, i32) {
    %c0_i32 = arith.constant 0 : i32
    %c0_i32_0 = arith.constant 0 : i32
    return %arg0, %arg1, %c0_i32 : i32, i32, i32
  }
}

</mosaic_0001>

<llo_original>
// kernel: tpu_custom_call.1
$region0: #{tpu_custom_call.1}
  #allocation0 [shape = 'u32[]', space=smem, size = 0x4, offset = 0x4, fixed_abs, tag = 'smem constant byte address 0x4 - core index']
  #allocation1 [shape = 'u32[144,128]{1,0:T(1,128)}', space=vmem, size = 0x12000, scoped, tag = 'internal scratch']
  #allocation2 [shape = 'f32[2,8,1]{2,1,0:T(8,128)}', space=vmem, size = 0x2000, scoped, tag = 'scratch operand']
  #allocation3 [shape = 'f32[2,8,1]{2,1,0:T(8,128)}', space=vmem, size = 0x2000, scoped, tag = 'scratch operand']
  #allocation4 [shape = 'f32[2,8,128]{2,1,0:T(8,128)}', space=vmem, size = 0x2000, scoped, tag = 'scratch operand']
  %s0 = inlined_call_operand.hbm [shape: f32[2,16,128], index: 0, kind: input, shape index: {}]
  %s1 = inlined_call_operand.hbm [shape: f32[8,128], index: 1, kind: input, shape index: {}]
  %s2 = inlined_call_operand.hbm [shape: f32[2,8,128], index: 2, kind: output, shape index: {}]
  %s3 = sld [smem:[#allocation0]]
  $region34: #{tpu_custom_call.1} parent=0
    _
  %s5 = ssub.s32 1, %s3
  %s6 = scalar_select 0, %s5, %s3
  $region1: #{tpu_custom_call.1} parent=0
    #allocation5 [shape = 'u8[16384]{0}', space=vmem, size = 0x4000, scoped, tag = 'input window, operand 0, single buffered']
    #allocation6 [shape = 's32[1]{0}', space=sflag, size = 0x4, scoped, tag = 'scoped memory for tpu_custom_call.1']
    #allocation7 [shape = 's32[1]{0}', space=sflag, size = 0x4, scoped, tag = 'scoped memory for tpu_custom_call.1']
    #allocation8 [shape = 'u8[4096]{0}', space=vmem, size = 0x1000, scoped, tag = 'input window, operand 1, single buffered']
    #allocation9 [shape = 's32[1]{0}', space=sflag, size = 0x4, scoped, tag = 'scoped memory for tpu_custom_call.1']
    #allocation10 [shape = 'u8[8192]{0}', space=vmem, size = 0x2000, scoped, tag = 'output window, operand 0, single buffered']
    %7 = vsyncpa [#allocation6], 0
    %8 = vsyncpa [#allocation9], 0
    %9 = vsyncpa [#allocation7], 0
    // Predicated region
    $region2: #{tpu_custom_call.1} parent=1 // pred_check
      _
    $region3: #{tpu_custom_call.1} parent=1 // pred_check_branch
      %11 = sbr.rel (0) target = $region5
    $region4: #{tpu_custom_call.1} parent=1 // pred_region
      %s13 = ssub.s32 512, 512
      %14 = vsyncadd [#allocation6], %s13
      %s15 = sshll.u32 [#allocation5], 4
      %s16 = int_to_ptr.vmem [resolvable:$true] %s15
      %21 = dma.hbm_to_vmem [thread:$0]  %s0, 512, %s16, [#allocation6], 128, 128, 8
    $region5: #{tpu_custom_call.1} parent=1 // pred_fallthru
      _
    // Predicated region
    $region6: #{tpu_custom_call.1} parent=1 // pred_check
      _
    $region7: #{tpu_custom_call.1} parent=1 // pred_check_branch
      %23 = sbr.rel (0) target = $region9
    $region8: #{tpu_custom_call.1} parent=1 // pred_region
      %s25 = ssub.s32 128, 128
      %26 = vsyncadd [#allocation9], %s25
      %s28 = sshll.u32 [#allocation8], 4
      %s29 = int_to_ptr.vmem [resolvable:$true] %s28
      %31 = dma.hbm_to_vmem [thread:$0]  %s1, 128, %s29, [#allocation9]
    $region9: #{tpu_custom_call.1} parent=1 // pred_fallthru
      _
    // Predicated region
    $region10: #{tpu_custom_call.1} parent=1 // pred_check
      _
    $region11: #{tpu_custom_call.1} parent=1 // pred_check_branch
      %33 = sbr.rel (0) target = $region13
    $region12: #{tpu_custom_call.1} parent=1 // pred_region
      %34 = dma.done [#allocation6], 512
    $region13: #{tpu_custom_call.1} parent=1 // pred_fallthru
      _
    // Predicated region
    $region14: #{tpu_custom_call.1} parent=1 // pred_check
      _
    $region15: #{tpu_custom_call.1} parent=1 // pred_check_branch
      %36 = sbr.rel (0) target = $region17
    $region16: #{tpu_custom_call.1} parent=1 // pred_region
      %37 = dma.done [#allocation9], 128
    $region17: #{tpu_custom_call.1} parent=1 // pred_fallthru
      _
    %p38 = scmp.eq.s32.totalorder 0, 0
    // Predicated region
    $region18: #{tpu_custom_call.1} parent=1 // pred_check
      %p39 = pneg %p38
    $region19: #{tpu_custom_call.1} parent=1 // pred_check_branch
      %41 = sbr.rel (%p39) target = $region21
    $region20: #{tpu_custom_call.1} parent=1 // pred_region
      %vm42 = vcmask 7168
      %43 = vst.msk [vmem:[#allocation2] sm:$0xff] %vm42, -inf
      %44 = vst.msk [vmem:[#allocation2 + $0x8] sm:$0xff] %vm42, -inf
      %45 = vst.msk [vmem:[#allocation3] sm:$0xff] %vm42, 0.0
      %46 = vst.msk [vmem:[#allocation3 + $0x8] sm:$0xff] %vm42, 0.0
      %47 = vst [vmem:[#allocation4] sm:$0xff] 0.0
      %48 = vst [vmem:[#allocation4 + $0x8] sm:$0xff] 0.0
    $region21: #{tpu_custom_call.1} parent=1 // pred_fallthru
      _
    %v49 = vld [vmem:[#allocation8] sm:$0xff]
    %v50 = vld [vmem:[#allocation5] sm:$0xff]
    %v51 = vld [vmem:[#allocation5 + $0x8] sm:$0xff]
    %52 = vmatprep.subr.mxu0 0.0
    %53 = vmatpush1.xpose.msra.mxu0 0.0
    %54 = vmatprep.subr.mxu0 0.0
    %55 = vmatpush1.xpose.msra.mxu0 0.0
    %56 = vmatprep.subr.mxu0 0.0
    %57 = vmatpush1.xpose.msra.mxu0 0.0
    %58 = vmatprep.subr.mxu0 0.0
    %59 = vmatpush1.xpose.msra.mxu0 0.0
    %60 = vmatprep.subr.mxu0 0.0
    %61 = vmatpush1.xpose.msra.mxu0 0.0
    %62 = vmatprep.subr.mxu0 0.0
    %63 = vmatpush1.xpose.msra.mxu0 0.0
    %64 = vmatprep.subr.mxu0 0.0
    %65 = vmatpush1.xpose.msra.mxu0 0.0
    %66 = vmatprep.subr.mxu0 0.0
    %67 = vmatpush1.xpose.msra.mxu0 0.0
    %68 = vmatprep.subr.mxu0 0.0
    %69 = vmatpush1.xpose.msra.mxu0 0.0
    %70 = vmatprep.subr.mxu0 0.0
    %71 = vmatpush1.xpose.msra.mxu0 0.0
    %72 = vmatprep.subr.mxu0 0.0
    %73 = vmatpush1.xpose.msra.mxu0 0.0
    %74 = vmatprep.subr.mxu0 0.0
    %75 = vmatpush1.xpose.msra.mxu0 0.0
    %76 = vmatprep.subr.mxu0 0.0
    %77 = vmatpush1.xpose.msra.mxu0 0.0
    %78 = vmatprep.subr.mxu0 0.0
    %79 = vmatpush1.xpose.msra.mxu0 0.0
    %80 = vmatprep.subr.mxu0 0.0
    %81 = vmatpush1.xpose.msra.mxu0 %v51
    %82 = vmatprep.subr.mxu0 0.0
    %83 = vmatpush1.xpose.msra.mxu0 %v50
    %84 = vmatprep.subr.mxu0 0.0
    %85 = vmatpush2.xpose.msra.mxu0 0.0
    %86 = vmatprep.subr.mxu0 0.0
    %87 = vmatpush2.xpose.msra.mxu0 0.0
    %88 = vmatprep.subr.mxu0 0.0
    %89 = vmatpush2.xpose.msra.mxu0 0.0
    %90 = vmatprep.subr.mxu0 0.0
    %91 = vmatpush2.xpose.msra.mxu0 0.0
    %92 = vmatprep.subr.mxu0 0.0
    %93 = vmatpush2.xpose.msra.mxu0 0.0
    %94 = vmatprep.subr.mxu0 0.0
    %95 = vmatpush2.xpose.msra.mxu0 0.0
    %96 = vmatprep.subr.mxu0 0.0
    %97 = vmatpush2.xpose.msra.mxu0 0.0
    %98 = vmatprep.subr.mxu0 0.0
    %99 = vmatpush2.xpose.msra.mxu0 0.0
    %100 = vmatprep.subr.mxu0 0.0
    %101 = vmatpush2.xpose.msra.mxu0 0.0
    %102 = vmatprep.subr.mxu0 0.0
    %103 = vmatpush2.xpose.msra.mxu0 0.0
    %104 = vmatprep.subr.mxu0 0.0
    %105 = vmatpush2.xpose.msra.mxu0 0.0
    %106 = vmatprep.subr.mxu0 0.0
    %107 = vmatpush2.xpose.msra.mxu0 0.0
    %108 = vmatprep.subr.mxu0 0.0
    %109 = vmatpush2.xpose.msra.mxu0 0.0
    %110 = vmatprep.subr.mxu0 0.0
    %111 = vmatpush2.xpose.msra.mxu0 0.0
    %112 = vmatprep.subr.mxu0 0.0
    %113 = vmatpush2.xpose.msra.mxu0 0.0
    %114 = vmatprep.subr.mxu0 0.0
    %115 = vmatpush2.xpose.msra.mxu0 0.0
    %116 = vmatprep.mubr.f32.mxu0 0.0
    %117 = vmatmul.mubr.f32.gmra.mxu0 %v49
    %v118 = vpop.f32.mrf.mxu0
    %v119 = vadd.f32 0.0, %v118
    %v120 = vpop.f32.mrf.mxu0
    %121 = vdwg.mxu0
    %v122 = vld [vmem:[#allocation2] sm:$0xff]
    %vm123 = vcmask 130048
    %v124 = vsel %vm123, %v119, -inf
    %125 = vmax.xlane.f32.xlu0 %v124
    %v126 = vpop.xlane.xlu0 %125
    %v127 = vmax.f32 %v122, %v126
    %v128 = vsub.f32 %v122, %v127
    %v129 = vmul.f32 %v128, 1.442695
    %v130 = vpow.pop %v129
    %132 = vset.pattern.permute.xlu0 0
    %133 = vperm.xlu0 %132, %v127
    %v134 = vpop.permute.xlu0 %133
    %v136 = vsub.f32 %v119, %v134
    %v137 = vmul.f32 %v136, 1.442695
    %v138 = vpow.pop %v137
    %v139 = vld [vmem:[#allocation3] sm:$0xff]
    %v140 = vmul.f32 %v130, %v139
    %v141 = vsel %vm123, %v138, 0.0
    %142 = vadd.xlane.f32.xlu0 %v141
    %v143 = vpop.xlane.xlu0 %142
    %v144 = vadd.f32 %v140, %v143
    %vm145 = vcmask 7168
    %146 = vst.msk [vmem:[#allocation3] sm:$0xff] %vm145, %v144
    %v148 = vsel %vm123, %v138, 0
    %150 = vmatprep.subr.mxu0 0.0
    %151 = vmatpush1.msra.mxu0 0.0
    %152 = vmatprep.subr.mxu0 0.0
    %153 = vmatpush1.msra.mxu0 0.0
    %154 = vmatprep.subr.mxu0 0.0
    %155 = vmatpush1.msra.mxu0 0.0
    %156 = vmatprep.subr.mxu0 0.0
    %157 = vmatpush1.msra.mxu0 0.0
    %158 = vmatprep.subr.mxu0 0.0
    %159 = vmatpush1.msra.mxu0 0.0
    %160 = vmatprep.subr.mxu0 0.0
    %161 = vmatpush1.msra.mxu0 0.0
    %162 = vmatprep.subr.mxu0 0.0
    %163 = vmatpush1.msra.mxu0 0.0
    %164 = vmatprep.subr.mxu0 0.0
    %165 = vmatpush1.msra.mxu0 0.0
    %166 = vmatprep.subr.mxu0 0.0
    %167 = vmatpush1.msra.mxu0 0.0
    %168 = vmatprep.subr.mxu0 0.0
    %169 = vmatpush1.msra.mxu0 0.0
    %170 = vmatprep.subr.mxu0 0.0
    %171 = vmatpush1.msra.mxu0 0.0
    %172 = vmatprep.subr.mxu0 0.0
    %173 = vmatpush1.msra.mxu0 0.0
    %174 = vmatprep.subr.mxu0 0.0
    %175 = vmatpush1.msra.mxu0 0.0
    %176 = vmatprep.subr.mxu0 0.0
    %177 = vmatpush1.msra.mxu0 0.0
    %178 = vmatprep.subr.mxu0 0.0
    %179 = vmatpush1.msra.mxu0 %v51
    %180 = vmatprep.subr.mxu0 0.0
    %181 = vmatpush1.msra.mxu0 %v50
    %182 = vmatprep.subr.mxu0 0.0
    %183 = vmatpush2.msra.mxu0 0.0
    %184 = vmatprep.subr.mxu0 0.0
    %185 = vmatpush2.msra.mxu0 0.0
    %186 = vmatprep.subr.mxu0 0.0
    %187 = vmatpush2.msra.mxu0 0.0
    %188 = vmatprep.subr.mxu0 0.0
    %189 = vmatpush2.msra.mxu0 0.0
    %190 = vmatprep.subr.mxu0 0.0
    %191 = vmatpush2.msra.mxu0 0.0
    %192 = vmatprep.subr.mxu0 0.0
    %193 = vmatpush2.msra.mxu0 0.0
    %194 = vmatprep.subr.mxu0 0.0
    %195 = vmatpush2.msra.mxu0 0.0
    %196 = vmatprep.subr.mxu0 0.0
    %197 = vmatpush2.msra.mxu0 0.0
    %198 = vmatprep.subr.mxu0 0.0
    %199 = vmatpush2.msra.mxu0 0.0
    %200 = vmatprep.subr.mxu0 0.0
    %201 = vmatpush2.msra.mxu0 0.0
    %202 = vmatprep.subr.mxu0 0.0
    %203 = vmatpush2.msra.mxu0 0.0
    %204 = vmatprep.subr.mxu0 0.0
    %205 = vmatpush2.msra.mxu0 0.0
    %206 = vmatprep.subr.mxu0 0.0
    %207 = vmatpush2.msra.mxu0 0.0
    %208 = vmatprep.subr.mxu0 0.0
    %209 = vmatpush2.msra.mxu0 0.0
    %210 = vmatprep.subr.mxu0 0.0
    %211 = vmatpush2.msra.mxu0 0.0
    %212 = vmatprep.subr.mxu0 0.0
    %213 = vmatpush2.msra.mxu0 0.0
    %214 = vmatprep.mubr.f32.mxu0 0.0
    %215 = vmatmul.mubr.f32.gmra.mxu0 %v148
    %v216 = vpop.f32.mrf.mxu0
    %v217 = vadd.f32 0.0, %v216
    %v218 = vpop.f32.mrf.mxu0
    %219 = vdwg.mxu0
    %v220 = vld [vmem:[#allocation4] sm:$0xff]
    %222 = vset.pattern.permute.xlu0 0
    %223 = vperm.xlu0 %222, %v130
    %v224 = vpop.permute.xlu0 %223
    %v226 = vmul.f32 %v224, %v220
    %v227 = vadd.f32 %v226, %v217
    %228 = vst [vmem:[#allocation4] sm:$0xff] %v227
    %229 = vst.msk [vmem:[#allocation2] sm:$0xff] %vm145, %v127
    %s230 = scalar_lea.vmem [#allocation5], 16
    %v231 = vld [vmem:[%s230] sm:$0xff]
    %v232 = vld [vmem:[%s230 + $0x8] sm:$0xff]
    %233 = vmatprep.subr.mxu0 0.0
    %234 = vmatpush1.xpose.msra.mxu0 0.0
    %235 = vmatprep.subr.mxu0 0.0
    %236 = vmatpush1.xpose.msra.mxu0 0.0
    %237 = vmatprep.subr.mxu0 0.0
    %238 = vmatpush1.xpose.msra.mxu0 0.0
    %239 = vmatprep.subr.mxu0 0.0
    %240 = vmatpush1.xpose.msra.mxu0 0.0
    %241 = vmatprep.subr.mxu0 0.0
    %242 = vmatpush1.xpose.msra.mxu0 0.0
    %243 = vmatprep.subr.mxu0 0.0
    %244 = vmatpush1.xpose.msra.mxu0 0.0
    %245 = vmatprep.subr.mxu0 0.0
    %246 = vmatpush1.xpose.msra.mxu0 0.0
    %247 = vmatprep.subr.mxu0 0.0
    %248 = vmatpush1.xpose.msra.mxu0 0.0
    %249 = vmatprep.subr.mxu0 0.0
    %250 = vmatpush1.xpose.msra.mxu0 0.0
    %251 = vmatprep.subr.mxu0 0.0
    %252 = vmatpush1.xpose.msra.mxu0 0.0
    %253 = vmatprep.subr.mxu0 0.0
    %254 = vmatpush1.xpose.msra.mxu0 0.0
    %255 = vmatprep.subr.mxu0 0.0
    %256 = vmatpush1.xpose.msra.mxu0 0.0
    %257 = vmatprep.subr.mxu0 0.0
    %258 = vmatpush1.xpose.msra.mxu0 0.0
    %259 = vmatprep.subr.mxu0 0.0
    %260 = vmatpush1.xpose.msra.mxu0 0.0
    %261 = vmatprep.subr.mxu0 0.0
    %262 = vmatpush1.xpose.msra.mxu0 %v232
    %263 = vmatprep.subr.mxu0 0.0
    %264 = vmatpush1.xpose.msra.mxu0 %v231
    %265 = vmatprep.subr.mxu0 0.0
    %266 = vmatpush2.xpose.msra.mxu0 0.0
    %267 = vmatprep.subr.mxu0 0.0
    %268 = vmatpush2.xpose.msra.mxu0 0.0
    %269 = vmatprep.subr.mxu0 0.0
    %270 = vmatpush2.xpose.msra.mxu0 0.0
    %271 = vmatprep.subr.mxu0 0.0
    %272 = vmatpush2.xpose.msra.mxu0 0.0
    %273 = vmatprep.subr.mxu0 0.0
    %274 = vmatpush2.xpose.msra.mxu0 0.0
    %275 = vmatprep.subr.mxu0 0.0
    %276 = vmatpush2.xpose.msra.mxu0 0.0
    %277 = vmatprep.subr.mxu0 0.0
    %278 = vmatpush2.xpose.msra.mxu0 0.0
    %279 = vmatprep.subr.mxu0 0.0
    %280 = vmatpush2.xpose.msra.mxu0 0.0
    %281 = vmatprep.subr.mxu0 0.0
    %282 = vmatpush2.xpose.msra.mxu0 0.0
    %283 = vmatprep.subr.mxu0 0.0
    %284 = vmatpush2.xpose.msra.mxu0 0.0
    %285 = vmatprep.subr.mxu0 0.0
    %286 = vmatpush2.xpose.msra.mxu0 0.0
    %287 = vmatprep.subr.mxu0 0.0
    %288 = vmatpush2.xpose.msra.mxu0 0.0
    %289 = vmatprep.subr.mxu0 0.0
    %290 = vmatpush2.xpose.msra.mxu0 0.0
    %291 = vmatprep.subr.mxu0 0.0
    %292 = vmatpush2.xpose.msra.mxu0 0.0
    %293 = vmatprep.subr.mxu0 0.0
    %294 = vmatpush2.xpose.msra.mxu0 0.0
    %295 = vmatprep.subr.mxu0 0.0
    %296 = vmatpush2.xpose.msra.mxu0 0.0
    %297 = vmatprep.mubr.f32.mxu0 0.0
    %298 = vmatmul.mubr.f32.gmra.mxu0 %v49
    %v299 = vpop.f32.mrf.mxu0
    %v300 = vadd.f32 0.0, %v299
    %v301 = vpop.f32.mrf.mxu0
    %302 = vdwg.mxu0
    %s303 = scalar_lea.vmem [#allocation2], 8
    %v304 = vld [vmem:[%s303] sm:$0xff]
    %v305 = vsel %vm123, %v300, -inf
    %306 = vmax.xlane.f32.xlu0 %v305
    %v307 = vpop.xlane.xlu0 %306
    %v308 = vmax.f32 %v304, %v307
    %v309 = vsub.f32 %v304, %v308
    %v310 = vmul.f32 %v309, 1.442695
    %v311 = vpow.pop %v310
    %313 = vset.pattern.permute.xlu0 0
    %314 = vperm.xlu0 %313, %v308
    %v315 = vpop.permute.xlu0 %314
    %v317 = vsub.f32 %v300, %v315
    %v318 = vmul.f32 %v317, 1.442695
    %v319 = vpow.pop %v318
    %s320 = scalar_lea.vmem [#allocation3], 8
    %v321 = vld [vmem:[%s320] sm:$0xff]
    %v322 = vmul.f32 %v311, %v321
    %v323 = vsel %vm123, %v319, 0.0
    %324 = vadd.xlane.f32.xlu0 %v323
    %v325 = vpop.xlane.xlu0 %324
    %v326 = vadd.f32 %v322, %v325
    %327 = vst.msk [vmem:[%s320] sm:$0xff] %vm145, %v326
    %v329 = vsel %vm123, %v319, 0
    %331 = vmatprep.subr.mxu0 0.0
    %332 = vmatpush1.msra.mxu0 0.0
    %333 = vmatprep.subr.mxu0 0.0
    %334 = vmatpush1.msra.mxu0 0.0
    %335 = vmatprep.subr.mxu0 0.0
    %336 = vmatpush1.msra.mxu0 0.0
    %337 = vmatprep.subr.mxu0 0.0
    %338 = vmatpush1.msra.mxu0 0.0
    %339 = vmatprep.subr.mxu0 0.0
    %340 = vmatpush1.msra.mxu0 0.0
    %341 = vmatprep.subr.mxu0 0.0
    %342 = vmatpush1.msra.mxu0 0.0
    %343 = vmatprep.subr.mxu0 0.0
    %344 = vmatpush1.msra.mxu0 0.0
    %345 = vmatprep.subr.mxu0 0.0
    %346 = vmatpush1.msra.mxu0 0.0
    %347 = vmatprep.subr.mxu0 0.0
    %348 = vmatpush1.msra.mxu0 0.0
    %349 = vmatprep.subr.mxu0 0.0
    %350 = vmatpush1.msra.mxu0 0.0
    %351 = vmatprep.subr.mxu0 0.0
    %352 = vmatpush1.msra.mxu0 0.0
    %353 = vmatprep.subr.mxu0 0.0
    %354 = vmatpush1.msra.mxu0 0.0
    %355 = vmatprep.subr.mxu0 0.0
    %356 = vmatpush1.msra.mxu0 0.0
    %357 = vmatprep.subr.mxu0 0.0
    %358 = vmatpush1.msra.mxu0 0.0
    %359 = vmatprep.subr.mxu0 0.0
    %360 = vmatpush1.msra.mxu0 %v232
    %361 = vmatprep.subr.mxu0 0.0
    %362 = vmatpush1.msra.mxu0 %v231
    %363 = vmatprep.subr.mxu0 0.0
    %364 = vmatpush2.msra.mxu0 0.0
    %365 = vmatprep.subr.mxu0 0.0
    %366 = vmatpush2.msra.mxu0 0.0
    %367 = vmatprep.subr.mxu0 0.0
    %368 = vmatpush2.msra.mxu0 0.0
    %369 = vmatprep.subr.mxu0 0.0
    %370 = vmatpush2.msra.mxu0 0.0
    %371 = vmatprep.subr.mxu0 0.0
    %372 = vmatpush2.msra.mxu0 0.0
    %373 = vmatprep.subr.mxu0 0.0
    %374 = vmatpush2.msra.mxu0 0.0
    %375 = vmatprep.subr.mxu0 0.0
    %376 = vmatpush2.msra.mxu0 0.0
    %377 = vmatprep.subr.mxu0 0.0
    %378 = vmatpush2.msra.mxu0 0.0
    %379 = vmatprep.subr.mxu0 0.0
    %380 = vmatpush2.msra.mxu0 0.0
    %381 = vmatprep.subr.mxu0 0.0
    %382 = vmatpush2.msra.mxu0 0.0
    %383 = vmatprep.subr.mxu0 0.0
    %384 = vmatpush2.msra.mxu0 0.0
    %385 = vmatprep.subr.mxu0 0.0
    %386 = vmatpush2.msra.mxu0 0.0
    %387 = vmatprep.subr.mxu0 0.0
    %388 = vmatpush2.msra.mxu0 0.0
    %389 = vmatprep.subr.mxu0 0.0
    %390 = vmatpush2.msra.mxu0 0.0
    %391 = vmatprep.subr.mxu0 0.0
    %392 = vmatpush2.msra.mxu0 0.0
    %393 = vmatprep.subr.mxu0 0.0
    %394 = vmatpush2.msra.mxu0 0.0
    %395 = vmatprep.mubr.f32.mxu0 0.0
    %396 = vmatmul.mubr.f32.gmra.mxu0 %v329
    %v397 = vpop.f32.mrf.mxu0
    %v398 = vadd.f32 0.0, %v397
    %v399 = vpop.f32.mrf.mxu0
    %400 = vdwg.mxu0
    %s401 = scalar_lea.vmem [#allocation4], 8
    %v402 = vld [vmem:[%s401] sm:$0xff]
    %404 = vset.pattern.permute.xlu0 0
    %405 = vperm.xlu0 %404, %v311
    %v406 = vpop.permute.xlu0 %405
    %v408 = vmul.f32 %v406, %v402
    %v409 = vadd.f32 %v408, %v398
    %410 = vst [vmem:[%s401] sm:$0xff] %v409
    %411 = vst.msk [vmem:[%s303] sm:$0xff] %vm145, %v308
    // Predicated region
    $region22: #{tpu_custom_call.1} parent=1 // pred_check
      %p412 = pneg %p38
    $region23: #{tpu_custom_call.1} parent=1 // pred_check_branch
      %414 = sbr.rel (%p412) target = $region25
    $region24: #{tpu_custom_call.1} parent=1 // pred_region
      %v415 = vld [vmem:[#allocation3] sm:$0xff]
      %v416 = vld [vmem:[#allocation3 + $0x8] sm:$0xff]
      %v417 = vrcp.pop %v415
      %v418 = vmul.f32 1.0, %v417
      %v419 = vrcp.pop %v416
      %v420 = vmul.f32 1.0, %v419
      %v421 = vld [vmem:[#allocation4] sm:$0xff]
      %v422 = vld [vmem:[#allocation4 + $0x8] sm:$0xff]
      %424 = vset.pattern.permute.xlu0 0
      %425 = vperm.xlu0 %424, %v418
      %v426 = vpop.permute.xlu0 %425
      %429 = vset.pattern.permute.xlu0 0
      %430 = vperm.xlu0 %429, %v420
      %v431 = vpop.permute.xlu0 %430
      %v433 = vmul.f32 %v421, %v426
      %v434 = vmul.f32 %v422, %v431
      %435 = vst [vmem:[#allocation10] sm:$0xff] %v433
      %436 = vst [vmem:[#allocation10 + $0x8] sm:$0xff] %v434
    $region25: #{tpu_custom_call.1} parent=1 // pred_fallthru
      _
    // Predicated region
    $region26: #{tpu_custom_call.1} parent=1 // pred_check
      _
    $region27: #{tpu_custom_call.1} parent=1 // pred_check_branch
      %438 = sbr.rel (0) target = $region29
    $region28: #{tpu_custom_call.1} parent=1 // pred_region
      %s440 = ssub.s32 256, 256
      %441 = vsyncadd [#allocation7], %s440
      %s442 = sshll.u32 [#allocation10], 4
      %s443 = int_to_ptr.vmem [resolvable:$true] %s442
      %448 = dma.vmem_to_hbm [thread:$0]  %s443, 256, %s2, [#allocation7], 128, 128, 8
    $region29: #{tpu_custom_call.1} parent=1 // pred_fallthru
      _
    // Predicated region
    $region30: #{tpu_custom_call.1} parent=1 // pred_check
      _
    $region31: #{tpu_custom_call.1} parent=1 // pred_check_branch
      %450 = sbr.rel (0) target = $region33
    $region32: #{tpu_custom_call.1} parent=1 // pred_region
      %451 = dma.done [#allocation7], 256
    $region33: #{tpu_custom_call.1} parent=1 // pred_fallthru
      _
    %452 = vsyncpa [#allocation6], 1
    %453 = vsyncpa [#allocation9], 1
    %454 = vsyncpa [#allocation7], 1

</llo_original>
